<compile_context>
chip_gen: v6e
topology: v6e:2x2x1
jax: 0.10.0
libtpu: 0.0.40
codegen_flags: <defaults>
</compile_context>

<pallas_src>
import jax
import jax.numpy as jnp
from jax.experimental import pallas as pl
from jax.experimental.pallas import tpu as pltpu


def _round_up(x, m):
    return ((x + m - 1) // m) * m


# ----------------------------------------------------------------------------
# Fused kernel: per tile of tokens, build a scaled one-hot from the ids and do
# one MXU matmul against the (VMEM-resident) embedding table.
#   out[r, :] = keep_scale[ids[r]] * weight[ids[r], :]
# ----------------------------------------------------------------------------
def _embed_gather_kernel(words_ref, scale_ref, w_ref, out_ref):
    # words_ref : (tile_n, 1) int32   token ids for this tile
    # scale_ref : (1, V)      wdtype  per-vocab-row keep/(1-p) scale (ones in eval)
    # w_ref     : (V, E)      wdtype  full embedding table (resident in VMEM)
    # out_ref   : (tile_n, E) wdtype
    tile_n = out_ref.shape[0]
    vocab = w_ref.shape[0]
    ids = words_ref[...]                                              # (tile_n, 1)
    iota = jax.lax.broadcasted_iota(jnp.int32, (tile_n, vocab), 1)    # (tile_n, V)
    one_hot = (iota == ids).astype(w_ref.dtype)                       # (tile_n, V)
    one_hot = one_hot * scale_ref[...]                                # fuse row dropout
    out_ref[...] = jnp.dot(
        one_hot, w_ref[...], preferred_element_type=jnp.float32
    ).astype(out_ref.dtype)


# ----------------------------------------------------------------------------
# Per-row keep scale (the only "dropout" state).  Tiny: V values.
# ----------------------------------------------------------------------------
def make_keep_scale(key, vocab, dropout, dtype):
    keep = jax.random.bernoulli(key, 1.0 - dropout, (1, vocab))
    return (keep.astype(jnp.float32) / (1.0 - dropout)).astype(dtype)


# ----------------------------------------------------------------------------
# Module-equivalent wrapper: EmbeddDropout.forward(embedding, words, training)
# ----------------------------------------------------------------------------
def embedd_dropout_forward(weight, words, *, dropout, training, key=None, tile_n=256):
    assert 0.0 <= dropout < 1.0, "dropout must be in [0, 1)"
    V, E = weight.shape
    B, S = words.shape
    wdtype = weight.dtype

    if dropout and training:
        if key is None:
            key = jax.random.PRNGKey(0)
        keep_scale = make_keep_scale(key, V, dropout, wdtype)
    else:
        keep_scale = jnp.ones((1, V), wdtype)

    # Flatten tokens, pad to a multiple of the tile size (pad ids = 0, sliced off).
    words_flat = words.reshape(-1).astype(jnp.int32)
    N = words_flat.shape[0]
    tile_n = min(tile_n, _round_up(N, 8))
    n_pad = _round_up(N, tile_n)
    words_pad = jnp.pad(words_flat, (0, n_pad - N)).reshape(n_pad, 1)

    itemsize = jnp.dtype(wdtype).itemsize
    vmem_bytes = (
        2 * V * E * itemsize          # table (double buffered by the pipeline)
        + 2 * V * itemsize            # keep scale
        + 2 * tile_n * 4              # token ids
        + 2 * tile_n * E * itemsize   # output tiles
        + (2 << 20)                   # headroom
    )
    vmem_bytes = max(int(vmem_bytes), 8 << 20)

    out = pl.pallas_call(
        _embed_gather_kernel,
        grid=(n_pad // tile_n,),
        in_specs=[
            pl.BlockSpec((tile_n, 1), lambda i: (i, 0)),  # token ids
            pl.BlockSpec((1, V), lambda i: (0, 0)),       # keep scale (resident)
            pl.BlockSpec((V, E), lambda i: (0, 0)),       # full table (resident)
        ],
        out_specs=pl.BlockSpec((tile_n, E), lambda i: (i, 0)),
        out_shape=jax.ShapeDtypeStruct((n_pad, E), wdtype),
        compiler_params=pltpu.CompilerParams(
            dimension_semantics=("parallel",),
            vmem_limit_bytes=vmem_bytes,
        ),
    )(words_pad, keep_scale, weight)

    return out[:N].reshape(B, S, E)


if __name__ == "__main__":
    DROPOUT = 0.5
    V, E = 64, 128          # vocab, embed_dim
    B, S = 2, 8             # batch, seq

    root = jax.random.PRNGKey(0)
    k_w, k_words, k_mask = jax.random.split(root, 3)
    # nn.Embedding default init: N(0, 1)
    weight = jax.random.normal(k_w, (V, E), dtype=jnp.float32)
    words = jax.random.randint(k_words, (B, S), 0, V, dtype=jnp.int32)

    # training path: row dropout fused into the gather
    out = embedd_dropout_forward(
        weight, words, dropout=DROPOUT, training=True, key=k_mask
    )
    out = jax.block_until_ready(out)
    assert out.shape == (B, S, E) and out.dtype == weight.dtype

    keep_scale = make_keep_scale(k_mask, V, DROPOUT, weight.dtype)   # same key -> same mask
    expected = (weight * keep_scale.reshape(V, 1))[words]
    assert jnp.allclose(out, expected, atol=1e-5, rtol=1e-5)

    # eval path (no dropout): must equal plain weight[words]
    out_eval = embedd_dropout_forward(weight, words, dropout=DROPOUT, training=False)
    out_eval = jax.block_until_ready(out_eval)
    assert jnp.allclose(out_eval, weight[words], atol=1e-5, rtol=1e-5)

    print("KERNEL_OK")
</pallas_src>

<mosaic_0001>
module attributes {stable_mosaic.version = 11 : i64} {
  func.func @_embed_gather_kernel(%arg0: i32, %arg1: memref<16x1xi32, #tpu.memory_space<vmem>>, %arg2: memref<1x64xf32, #tpu.memory_space<vmem>>, %arg3: memref<64x128xf32, #tpu.memory_space<vmem>>, %arg4: memref<16x128xf32, #tpu.memory_space<vmem>>) attributes {dimension_semantics = [#tpu.dimension_semantics<parallel>], iteration_bounds = array<i64: 1>, scalar_prefetch = 0 : i64, scratch_operands = 0 : i64, tpu.core_type = #tpu.core_type<tc>, window_params = [{transform_indices = @transform_0, window_bounds = array<i64: 16, 1>}, {pipeline_mode = #tpu.pipeline_mode<synchronous>, transform_indices = @transform_1, window_bounds = array<i64: 1, 64>}, {pipeline_mode = #tpu.pipeline_mode<synchronous>, transform_indices = @transform_2, window_bounds = array<i64: 64, 128>}, {transform_indices = @transform_3, window_bounds = array<i64: 16, 128>}]} {
    %c0 = arith.constant 0 : index
    %c0_0 = arith.constant 0 : index
    %0 = vector.load %arg1[%c0, %c0_0] : memref<16x1xi32, #tpu.memory_space<vmem>>, vector<16x1xi32>
    %1 = tpu.iota {dimensions = array<i32: 1>} : vector<16x64xi32>
    %2 = vector.broadcast %0 : vector<16x1xi32> to vector<16x64xi32>
    %3 = arith.cmpi eq, %1, %2 : vector<16x64xi32>
    %4 = arith.extui %3 : vector<16x64xi1> to vector<16x64xi32>
    %5 = arith.sitofp %4 : vector<16x64xi32> to vector<16x64xf32>
    %c0_1 = arith.constant 0 : index
    %c0_2 = arith.constant 0 : index
    %6 = vector.load %arg2[%c0_1, %c0_2] : memref<1x64xf32, #tpu.memory_space<vmem>>, vector<1x64xf32>
    %7 = vector.broadcast %6 : vector<1x64xf32> to vector<16x64xf32>
    %8 = arith.mulf %5, %7 : vector<16x64xf32>
    %c0_3 = arith.constant 0 : index
    %c0_4 = arith.constant 0 : index
    %9 = vector.load %arg3[%c0_3, %c0_4] : memref<64x128xf32, #tpu.memory_space<vmem>>, vector<64x128xf32>
    %cst = arith.constant dense<0.000000e+00> : vector<16x128xf32>
    %10 = tpu.matmul %8, %9, %cst {dimension_numbers = #tpu.dot_dimension_numbers<[1], [0], [0], [1], [0, 0, 1, 1], [], []>} : vector<16x64xf32>, vector<64x128xf32>, vector<16x128xf32> -> vector<16x128xf32>
    %c0_5 = arith.constant 0 : index
    %c0_6 = arith.constant 0 : index
    %11 = vector.load %arg4[%c0_5, %c0_6] : memref<16x128xf32, #tpu.memory_space<vmem>>, vector<16x128xf32>
    tpu.vector_store %arg4[%c0_5, %c0_6], %10 {strides = array<i32>} : memref<16x128xf32, #tpu.memory_space<vmem>>, vector<16x128xf32>,
    return
  }
  func.func @transform_0(%arg0: i32) -> (i32, i32) {
    %c0_i32 = arith.constant 0 : i32
    %c0_i32_0 = arith.constant 0 : i32
    return %arg0, %c0_i32 : i32, i32
  }
  func.func @transform_1(%arg0: i32) -> (i32, i32) {
    %c0_i32 = arith.constant 0 : i32
    %c0_i32_0 = arith.constant 0 : i32
    %c0_i32_1 = arith.constant 0 : i32
    return %c0_i32, %c0_i32_0 : i32, i32
  }
  func.func @transform_2(%arg0: i32) -> (i32, i32) {
    %c0_i32 = arith.constant 0 : i32
    %c0_i32_0 = arith.constant 0 : i32
    %c0_i32_1 = arith.constant 0 : i32
    return %c0_i32, %c0_i32_0 : i32, i32
  }
  func.func @transform_3(%arg0: i32) -> (i32, i32) {
    %c0_i32 = arith.constant 0 : i32
    %c0_i32_0 = arith.constant 0 : i32
    return %arg0, %c0_i32 : i32, i32
  }
}

</mosaic_0001>

<llo_original>
// kernel: tpu_custom_call.1
$region0: #{tpu_custom_call.1}
  #allocation0 [shape = 'u32[]', space=smem, size = 0x4, offset = 0x4, fixed_abs, tag = 'smem constant byte address 0x4 - core index']
  #allocation1 [shape = 'u32[144,128]{1,0:T(1,128)}', space=vmem, size = 0x12000, scoped, tag = 'internal scratch']
  %s0 = inlined_call_operand.vmem [shape: s32[16,1], index: 0, kind: input, shape index: {}]
  %s1 = inlined_call_operand.vmem [shape: f32[1,64], index: 1, kind: input, shape index: {}]
  %s2 = inlined_call_operand.hbm [shape: f32[64,128], index: 2, kind: input, shape index: {}]
  %s3 = inlined_call_operand.hbm [shape: f32[16,128], index: 3, kind: output, shape index: {}]
  %s4 = sld [smem:[#allocation0]]
  $region26: #{tpu_custom_call.1} parent=0
    _
  %s6 = ssub.s32 1, %s4
  %s7 = scalar_select 0, %s6, %s4
  $region1: #{tpu_custom_call.1} parent=0
    #allocation2 [shape = 'u8[32768]{0}', space=vmem, size = 0x8000, scoped, tag = 'input window, operand 2, single buffered']
    #allocation3 [shape = 's32[1]{0}', space=sflag, size = 0x4, scoped, tag = 'scoped memory for tpu_custom_call.1']
    #allocation4 [shape = 's32[1]{0}', space=sflag, size = 0x4, scoped, tag = 'scoped memory for tpu_custom_call.1']
    #allocation5 [shape = 'u8[8192]{0}', space=vmem, size = 0x2000, scoped, tag = 'output window, operand 0, single buffered']
    %8 = vsyncpa [#allocation3], 0
    %9 = vsyncpa [#allocation4], 0
    // Predicated region
    $region2: #{tpu_custom_call.1} parent=1 // pred_check
      _
    $region3: #{tpu_custom_call.1} parent=1 // pred_check_branch
      %11 = sbr.rel (0) target = $region5
    $region4: #{tpu_custom_call.1} parent=1 // pred_region
      _
    $region5: #{tpu_custom_call.1} parent=1 // pred_fallthru
      _
    // Predicated region
    $region6: #{tpu_custom_call.1} parent=1 // pred_check
      _
    $region7: #{tpu_custom_call.1} parent=1 // pred_check_branch
      %13 = sbr.rel (0) target = $region9
    $region8: #{tpu_custom_call.1} parent=1 // pred_region
      _
    $region9: #{tpu_custom_call.1} parent=1 // pred_fallthru
      _
    // Predicated region
    $region10: #{tpu_custom_call.1} parent=1 // pred_check
      _
    $region11: #{tpu_custom_call.1} parent=1 // pred_check_branch
      %15 = sbr.rel (0) target = $region13
    $region12: #{tpu_custom_call.1} parent=1 // pred_region
      %s17 = ssub.s32 1024, 1024
      %18 = vsyncadd [#allocation3], %s17
      %s19 = sshll.u32 [#allocation2], 4
      %s20 = int_to_ptr.vmem [resolvable:$true] %s19
      %25 = dma.hbm_to_vmem [thread:$0]  %s2, 1024, %s20, [#allocation3], 128, 128, 8
    $region13: #{tpu_custom_call.1} parent=1 // pred_fallthru
      _
    // Predicated region
    $region14: #{tpu_custom_call.1} parent=1 // pred_check
      _
    $region15: #{tpu_custom_call.1} parent=1 // pred_check_branch
      %27 = sbr.rel (0) target = $region17
    $region16: #{tpu_custom_call.1} parent=1 // pred_region
      %28 = dma.done [#allocation3], 1024
    $region17: #{tpu_custom_call.1} parent=1 // pred_fallthru
      _
    %v29 = vld [vmem:[%s0] sm:$0xff]
    %v30 = vld [vmem:[%s0 + $0x8] sm:$0xff]
    %v31 = vlaneseq
    %v32 = vand.u32 %v31, 127
    %33 = vset.pattern.permute.xlu0 0
    %34 = vperm.xlu0 %33, %v29
    %v35 = vpop.permute.xlu0 %34
    %36 = vset.pattern.permute.xlu0 0
    %37 = vperm.xlu0 %36, %v30
    %v38 = vpop.permute.xlu0 %37
    %vm39 = vcmp.eq.s32.totalorder %v32, %v35
    %vm40 = vcmp.eq.s32.totalorder %v32, %v38
    %v41 = vsel %vm39, 1, 0
    %v42 = vsel %vm40, 1, 0
    %v43 = vcvt.s32.f32 %v41
    %v44 = vcvt.s32.f32 %v42
    %v45 = vld [vmem:[%s1] sm:$0x1]
    %v47 = vlaneseq
    %v48 = vshrl.u32 %v47, 7
    %v49 = vsub.s32 0, %v48
    %v50 = vrot.slane %v45, %v49
    %v52 = vmul.f32 %v43, %v50
    %v53 = vmul.f32 %v44, %v50
    %v54 = vld [vmem:[#allocation2] sm:$0xff]
    %v55 = vld [vmem:[#allocation2 + $0x8] sm:$0xff]
    %v56 = vld [vmem:[#allocation2 + $0x10] sm:$0xff]
    %v57 = vld [vmem:[#allocation2 + $0x18] sm:$0xff]
    %v58 = vld [vmem:[#allocation2 + $0x20] sm:$0xff]
    %v59 = vld [vmem:[#allocation2 + $0x28] sm:$0xff]
    %v60 = vld [vmem:[#allocation2 + $0x30] sm:$0xff]
    %v61 = vld [vmem:[#allocation2 + $0x38] sm:$0xff]
    %vm62 = vcmask 523264
    %v64 = vsel %vm62, %v52, 0
    %v67 = vsel %vm62, %v53, 0
    %69 = vmatprep.subr.mxu0 0.0
    %70 = vmatpush1.msra.mxu0 0.0
    %71 = vmatprep.subr.mxu0 0.0
    %72 = vmatpush1.msra.mxu0 0.0
    %73 = vmatprep.subr.mxu0 0.0
    %74 = vmatpush1.msra.mxu0 0.0
    %75 = vmatprep.subr.mxu0 0.0
    %76 = vmatpush1.msra.mxu0 0.0
    %77 = vmatprep.subr.mxu0 0.0
    %78 = vmatpush1.msra.mxu0 0.0
    %79 = vmatprep.subr.mxu0 0.0
    %80 = vmatpush1.msra.mxu0 0.0
    %81 = vmatprep.subr.mxu0 0.0
    %82 = vmatpush1.msra.mxu0 0.0
    %83 = vmatprep.subr.mxu0 0.0
    %84 = vmatpush1.msra.mxu0 0.0
    %85 = vmatprep.subr.mxu0 0.0
    %86 = vmatpush1.msra.mxu0 %v61
    %87 = vmatprep.subr.mxu0 0.0
    %88 = vmatpush1.msra.mxu0 %v60
    %89 = vmatprep.subr.mxu0 0.0
    %90 = vmatpush1.msra.mxu0 %v59
    %91 = vmatprep.subr.mxu0 0.0
    %92 = vmatpush1.msra.mxu0 %v58
    %93 = vmatprep.subr.mxu0 0.0
    %94 = vmatpush1.msra.mxu0 %v57
    %95 = vmatprep.subr.mxu0 0.0
    %96 = vmatpush1.msra.mxu0 %v56
    %97 = vmatprep.subr.mxu0 0.0
    %98 = vmatpush1.msra.mxu0 %v55
    %99 = vmatprep.subr.mxu0 0.0
    %100 = vmatpush1.msra.mxu0 %v54
    %101 = vmatprep.subr.mxu0 0.0
    %102 = vmatpush2.msra.mxu0 0.0
    %103 = vmatprep.subr.mxu0 0.0
    %104 = vmatpush2.msra.mxu0 0.0
    %105 = vmatprep.subr.mxu0 0.0
    %106 = vmatpush2.msra.mxu0 0.0
    %107 = vmatprep.subr.mxu0 0.0
    %108 = vmatpush2.msra.mxu0 0.0
    %109 = vmatprep.subr.mxu0 0.0
    %110 = vmatpush2.msra.mxu0 0.0
    %111 = vmatprep.subr.mxu0 0.0
    %112 = vmatpush2.msra.mxu0 0.0
    %113 = vmatprep.subr.mxu0 0.0
    %114 = vmatpush2.msra.mxu0 0.0
    %115 = vmatprep.subr.mxu0 0.0
    %116 = vmatpush2.msra.mxu0 0.0
    %117 = vmatprep.subr.mxu0 0.0
    %118 = vmatpush2.msra.mxu0 0.0
    %119 = vmatprep.subr.mxu0 0.0
    %120 = vmatpush2.msra.mxu0 0.0
    %121 = vmatprep.subr.mxu0 0.0
    %122 = vmatpush2.msra.mxu0 0.0
    %123 = vmatprep.subr.mxu0 0.0
    %124 = vmatpush2.msra.mxu0 0.0
    %125 = vmatprep.subr.mxu0 0.0
    %126 = vmatpush2.msra.mxu0 0.0
    %127 = vmatprep.subr.mxu0 0.0
    %128 = vmatpush2.msra.mxu0 0.0
    %129 = vmatprep.subr.mxu0 0.0
    %130 = vmatpush2.msra.mxu0 0.0
    %131 = vmatprep.subr.mxu0 0.0
    %132 = vmatpush2.msra.mxu0 0.0
    %133 = vmatprep.mubr.f32.mxu0 0.0
    %134 = vmatmul.mubr.f32.gmra.mxu0 %v64
    %v135 = vpop.f32.mrf.mxu0
    %v136 = vadd.f32 0.0, %v135
    %v137 = vpop.f32.mrf.mxu0
    %138 = vmatprep.mubr.f32.mxu0 0.0
    %139 = vmatmul.mubr.f32.gmra.mxu0 %v67
    %v140 = vpop.f32.mrf.mxu0
    %v141 = vadd.f32 0.0, %v140
    %v142 = vpop.f32.mrf.mxu0
    %143 = vdwg.mxu0
    %144 = vst [vmem:[#allocation5] sm:$0xff] %v136
    %145 = vst [vmem:[#allocation5 + $0x8] sm:$0xff] %v141
    // Predicated region
    $region18: #{tpu_custom_call.1} parent=1 // pred_check
      _
    $region19: #{tpu_custom_call.1} parent=1 // pred_check_branch
      %147 = sbr.rel (0) target = $region21
    $region20: #{tpu_custom_call.1} parent=1 // pred_region
      %s149 = ssub.s32 256, 256
      %150 = vsyncadd [#allocation4], %s149
      %s151 = sshll.u32 [#allocation5], 4
      %s152 = int_to_ptr.vmem [resolvable:$true] %s151
      %157 = dma.vmem_to_hbm [thread:$0]  %s152, 256, %s3, [#allocation4], 128, 128, 8
    $region21: #{tpu_custom_call.1} parent=1 // pred_fallthru
      _
    // Predicated region
    $region22: #{tpu_custom_call.1} parent=1 // pred_check
      _
    $region23: #{tpu_custom_call.1} parent=1 // pred_check_branch
      %159 = sbr.rel (0) target = $region25
    $region24: #{tpu_custom_call.1} parent=1 // pred_region
      %160 = dma.done [#allocation4], 256
    $region25: #{tpu_custom_call.1} parent=1 // pred_fallthru
      _
    %161 = vsyncpa [#allocation3], 1
    %162 = vsyncpa [#allocation4], 1

</llo_original>
